<compile_context>
chip_gen: v7x
topology: tpu7x:2x2x1
jax: 0.10.0
libtpu: 0.0.40
codegen_flags: <defaults>
</compile_context>

<pallas_src>
import math

import jax
import jax.numpy as jnp
from jax.experimental import pallas as pl
from jax.experimental.pallas import tpu as pltpu

# torch.finfo(torch.float32).eps -- the default eps F.rms_norm uses after x.float()
_RMS_EPS = 1.1920928955078125e-07


def pad_to_multiple(n, k=64):
    return (n + k - 1) // k * k


def _round_up(n, k):
    return (n + k - 1) // k * k


def _vmem_budget_bytes():
    """Per-generation usable-VMEM budget (bytes), with a v7x-safe fallback."""
    cap = None
    try:
        cap = int(pltpu.get_tpu_info().vmem_capacity_bytes)
    except Exception:
        cap = None
    if not cap or cap <= 0:
        cap = 64 * 1024 * 1024  # conservative default: v7x has 64 MiB per TensorCore
    # ~85% of physical VMEM, never above ~112 MiB (leave Mosaic scratch headroom).
    return min(int(cap * 0.85), 112 * 1024 * 1024)


def _rmsnorm_kernel(x_ref, o_ref):
    """F.rms_norm(x.float(), (dim,)).type_as(x) for one row tile."""
    x = x_ref[...].astype(jnp.float32)
    ms = jnp.mean(x * x, axis=-1, keepdims=True)
    o_ref[...] = (x * jax.lax.rsqrt(ms + _RMS_EPS)).astype(o_ref.dtype)


def _head_matmul_kernel(xn_ref, w_ref, o_ref):
    """(tm, dim) @ (dim, tn) -> (tm, tn); operands in x dtype, fp32 MXU accumulation."""
    o_ref[...] = jnp.dot(
        xn_ref[...], w_ref[...], preferred_element_type=jnp.float32
    ).astype(o_ref.dtype)


def prepare_softmax_head_weight(weight, compute_dtype):
    """One-time weight preparation (do this at init, NOT per forward).

    weight: (out_features, dim) in PyTorch FusedLinear layout.
    Returns (dim, out_pad) in `compute_dtype`, out_features padded to a multiple of 128.
    """
    out_features, dim = weight.shape
    out_pad = pad_to_multiple(out_features, 128)
    w = weight.astype(compute_dtype).T  # (dim, out_features): plain MXU-friendly layout
    if out_pad != out_features:
        w = jnp.pad(w, ((0, 0), (0, out_pad - out_features)))
    return w


def softmax_head_forward(x, w_prepared, n_classes, *, tm=256, tn=1024):
    """x: (..., dim); w_prepared: (dim, out_pad) from prepare_softmax_head_weight.

    Returns (..., n_classes), matching SoftmaxHead.forward semantics.
    """
    *lead, dim = x.shape
    n_rows = math.prod(lead) if lead else 1
    w_dim, out_pad = w_prepared.shape
    assert w_dim == dim, f"weight dim {w_dim} != x dim {dim}"
    assert out_pad % 128 == 0 and out_pad >= n_classes

    # FusedLinear does `weight.type_as(x)`; the prepared weight should already be in
    # x.dtype (cast here only as a fallback so semantics are preserved regardless).
    w = w_prepared if w_prepared.dtype == x.dtype else w_prepared.astype(x.dtype)

    itemsize = jnp.dtype(x.dtype).itemsize
    sublane = 8 * max(1, 4 // itemsize)  # 8 rows for fp32, 16 for bf16
    budget = _vmem_budget_bytes()

    x2 = x.reshape(n_rows, dim)

    # ---------- pass 1: RMSNorm, tiled over rows (hoisted out of the out-tile loop) ----------
    tm_norm = min(256, _round_up(max(n_rows, 1), sublane))
    while 1.25 * (4 * tm_norm * dim * itemsize) > budget and tm_norm > sublane:
        tm_norm = max(sublane, _round_up(tm_norm // 2, sublane))

    xn = pl.pallas_call(
        _rmsnorm_kernel,
        out_shape=jax.ShapeDtypeStruct((n_rows, dim), x.dtype),
        grid_spec=pltpu.PrefetchScalarGridSpec(
            num_scalar_prefetch=0,
            grid=(pl.cdiv(n_rows, tm_norm),),
            in_specs=[pl.BlockSpec((tm_norm, dim), lambda i: (i, 0))],
            out_specs=pl.BlockSpec((tm_norm, dim), lambda i: (i, 0)),
        ),
        compiler_params=pltpu.CompilerParams(
            dimension_semantics=("parallel",),
            vmem_limit_bytes=budget,
        ),
    )(x2)

    # ---------- pass 2: pure GEMM against a resident (dim, tn) weight block ----------
    def gemm_footprint(tm_, tn_):
        # double-buffered xn tile + weight tile + output tile
        return 2 * (tm_ * dim + dim * tn_ + tm_ * tn_) * itemsize

    tm_eff = min(tm, _round_up(max(n_rows, 1), sublane))
    # Candidate out tiles: multiples of 128 that divide out_pad, descending (<= tn).
    tn_cands = [t for t in range(min(tn, out_pad), 127, -128) if out_pad % t == 0]
    tn_eff = None
    while tn_eff is None:
        for t in tn_cands:
            if 1.25 * gemm_footprint(tm_eff, t) <= budget:
                tn_eff = t
                break
        if tn_eff is None:
            if tm_eff <= sublane:
                raise ValueError(
                    "SoftmaxHead tiles do not fit VMEM even at minimum tile sizes "
                    f"(dim={dim}, dtype={x.dtype}); a K-split kernel is required."
                )
            tm_eff = max(sublane, _round_up(tm_eff // 2, sublane))

    n_out_tiles = out_pad // tn_eff
    n_row_tiles = pl.cdiv(n_rows, tm_eff)

    out = pl.pallas_call(
        _head_matmul_kernel,
        out_shape=jax.ShapeDtypeStruct((n_rows, out_pad), x.dtype),
        grid_spec=pltpu.PrefetchScalarGridSpec(
            num_scalar_prefetch=0,
            # Out tiles outermost, rows innermost: each (dim, tn) weight block is DMA'd
            # from HBM once and reused across every row tile.
            grid=(n_out_tiles, n_row_tiles),
            in_specs=[
                pl.BlockSpec((tm_eff, dim), lambda j, i: (i, 0)),
                pl.BlockSpec((dim, tn_eff), lambda j, i: (0, j)),
            ],
            out_specs=pl.BlockSpec((tm_eff, tn_eff), lambda j, i: (i, j)),
        ),
        compiler_params=pltpu.CompilerParams(
            # Row axis "arbitrary": megacore (v7x) shards the out-tile axis, so the
            # weight is read from HBM once in total rather than once per TensorCore.
            dimension_semantics=("parallel", "arbitrary"),
            vmem_limit_bytes=budget,
        ),
    )(xn, w)

    # TODO(synk): v7x decode-shape options not implemented: fp8 weight blocks with a
    # per-block scale, and single-buffered manual weight DMA (memory_space=pl.ANY) to
    # reclaim the idle second weight buffer when VMEM-tight.

    return out[:, :n_classes].reshape(*lead, n_classes)


def _reference_forward(x, weight, n_classes):
    """Pure-jnp replica of SoftmaxHead.forward (weight in PyTorch (out, dim) layout)."""
    xf = x.astype(jnp.float32)
    ms = jnp.mean(xf * xf, axis=-1, keepdims=True)
    xn = (xf * jax.lax.rsqrt(ms + _RMS_EPS)).astype(x.dtype)
    w = weight.astype(x.dtype)
    out = jnp.einsum("...d,od->...o", xn, w, preferred_element_type=jnp.float32).astype(
        x.dtype
    )
    return out[..., :n_classes]


if __name__ == "__main__":
    key = jax.random.PRNGKey(0)
    batch, seq, dim = 2, 8, 32
    n_classes = 100
    out_padded = pad_to_multiple(n_classes, 64)  # 128: the module's head width

    k_x, k_w = jax.random.split(key)
    x = jax.random.normal(k_x, (batch, seq, dim), dtype=jnp.float32)

    # SoftmaxHead params: RMSNorm(affine=False) has none; FusedLinear(zero_init=True)
    # has a zero (out_padded, dim) weight. Prepare it ONCE (init-time), not per call.
    weight = jnp.zeros((out_padded, dim), dtype=jnp.float32)
    w_prep = prepare_softmax_head_weight(weight, x.dtype)

    out = jax.block_until_ready(softmax_head_forward(x, w_prep, n_classes))
    assert out.shape == (batch, seq, n_classes)
    assert jnp.all(out == 0.0)  # zero-init head => zero logits

    # Non-trivial weight (FusedLinear init without zero_init: randn/sqrt(in)*0.5).
    w_rand = jax.random.normal(k_w, (out_padded, dim), dtype=jnp.float32)
    w_rand = w_rand / math.sqrt(dim) * 0.5
    w_rand_prep = prepare_softmax_head_weight(w_rand, jnp.float32)

    got = jax.block_until_ready(softmax_head_forward(x, w_rand_prep, n_classes))
    want = _reference_forward(x, w_rand, n_classes)
    assert jnp.allclose(got, want, atol=1e-5, rtol=1e-5)

    # Ragged row count: exercises the pl.cdiv masked last row block (no padding copies).
    x_odd = jax.random.normal(k_x, (3, 5, dim), dtype=jnp.float32)
    got_odd = jax.block_until_ready(softmax_head_forward(x_odd, w_rand_prep, n_classes))
    want_odd = _reference_forward(x_odd, w_rand, n_classes)
    assert got_odd.shape == (3, 5, n_classes)
    assert jnp.allclose(got_odd, want_odd, atol=1e-5, rtol=1e-5)

    # bf16 activations: weight prepared once in bf16, matmul runs bf16 on the MXU
    # (matches FusedLinear's `weight.type_as(x)`), fp32 accumulation.
    x_bf = x.astype(jnp.bfloat16)
    w_bf_prep = prepare_softmax_head_weight(w_rand, jnp.bfloat16)
    got_bf = jax.block_until_ready(softmax_head_forward(x_bf, w_bf_prep, n_classes))
    want_bf = _reference_forward(x_bf, w_rand, n_classes)
    assert got_bf.shape == (batch, seq, n_classes)
    assert jnp.allclose(
        got_bf.astype(jnp.float32), want_bf.astype(jnp.float32), atol=2e-2, rtol=2e-2
    )

    print("KERNEL_OK")
</pallas_src>

<mosaic_0001>
module attributes {stable_mosaic.version = 11 : i64} {
  func.func @_rmsnorm_kernel(%arg0: i32, %arg1: memref<16x32xf32, #tpu.memory_space<vmem>>, %arg2: memref<16x32xf32, #tpu.memory_space<vmem>>) attributes {dimension_semantics = [#tpu.dimension_semantics<parallel>], iteration_bounds = array<i64: 1>, scalar_prefetch = 0 : i64, scratch_operands = 0 : i64, tpu.core_type = #tpu.core_type<tc>, window_params = [{transform_indices = @transform_0, window_bounds = array<i64: 16, 32>}, {transform_indices = @transform_1, window_bounds = array<i64: 16, 32>}]} {
    %c0 = arith.constant 0 : index
    %c0_0 = arith.constant 0 : index
    %0 = vector.load %arg1[%c0, %c0_0] : memref<16x32xf32, #tpu.memory_space<vmem>>, vector<16x32xf32>
    %1 = arith.mulf %0, %0 : vector<16x32xf32>
    %cst = arith.constant dense<0.000000e+00> : vector<16xf32>
    %2 = vector.multi_reduction <add>, %1, %cst [1] : vector<16x32xf32> to vector<16xf32>
    %3 = vector.shape_cast %2 : vector<16xf32> to vector<16x1xf32>
    %cst_1 = arith.constant 3.200000e+01 : f32
    %4 = vector.broadcast %cst_1 : f32 to vector<16x1xf32>
    %5 = arith.divf %3, %4 : vector<16x1xf32>
    %cst_2 = arith.constant 1.1920929E-7 : f32
    %6 = vector.broadcast %cst_2 : f32 to vector<16x1xf32>
    %7 = arith.addf %5, %6 : vector<16x1xf32>
    %8 = math.rsqrt %7 : vector<16x1xf32>
    %9 = vector.broadcast %8 : vector<16x1xf32> to vector<16x32xf32>
    %10 = arith.mulf %0, %9 : vector<16x32xf32>
    %c0_3 = arith.constant 0 : index
    %c0_4 = arith.constant 0 : index
    %11 = vector.load %arg2[%c0_3, %c0_4] : memref<16x32xf32, #tpu.memory_space<vmem>>, vector<16x32xf32>
    tpu.vector_store %arg2[%c0_3, %c0_4], %10 {strides = array<i32>} : memref<16x32xf32, #tpu.memory_space<vmem>>, vector<16x32xf32>,
    return
  }
  func.func @transform_0(%arg0: i32) -> (i32, i32) {
    %c0_i32 = arith.constant 0 : i32
    %c0_i32_0 = arith.constant 0 : i32
    return %arg0, %c0_i32 : i32, i32
  }
  func.func @transform_1(%arg0: i32) -> (i32, i32) {
    %c0_i32 = arith.constant 0 : i32
    %c0_i32_0 = arith.constant 0 : i32
    return %arg0, %c0_i32 : i32, i32
  }
}

</mosaic_0001>

<llo_original>
// kernel: tpu_custom_call.1
$region0: #{tpu_custom_call.1}
  #allocation0 [shape = 'u32[]', space=smem, size = 0x4, offset = 0x4, fixed_abs, tag = 'smem constant byte address 0x4 - core index']
  #allocation1 [shape = 'u32[144,128]{1,0:T(1,128)}', space=vmem, size = 0x12000, scoped, tag = 'internal scratch']
  %s0 = inlined_call_operand.hbm [shape: f32[16,32], index: 0, kind: input, shape index: {}]
  %s1 = inlined_call_operand.hbm [shape: f32[16,32], index: 1, kind: output, shape index: {}]
  %s2 = sld [smem:[#allocation0]]
  $region18: #{tpu_custom_call.1} parent=0
    _
  %s4 = ssub.s32 1, %s2
  %s5 = scalar_select 0, %s4, %s2
  $region1: #{tpu_custom_call.1} parent=0
    #allocation2 [shape = 'u8[8192]{0}', space=vmem, size = 0x2000, scoped, tag = 'input window, operand 0, single buffered']
    #allocation3 [shape = 's32[1]{0}', space=sflag, size = 0x4, scoped, tag = 'scoped memory for tpu_custom_call.1']
    #allocation4 [shape = 's32[1]{0}', space=sflag, size = 0x4, scoped, tag = 'scoped memory for tpu_custom_call.1']
    #allocation5 [shape = 'u8[8192]{0}', space=vmem, size = 0x2000, scoped, tag = 'output window, operand 0, single buffered']
    %6 = vsyncpa [#allocation3], 0
    %7 = vsyncpa [#allocation4], 0
    // Predicated region
    $region2: #{tpu_custom_call.1} parent=1 // pred_check
      _
    $region3: #{tpu_custom_call.1} parent=1 // pred_check_branch
      %9 = sbr.rel (0) target = $region5
    $region4: #{tpu_custom_call.1} parent=1 // pred_region
      %s11 = ssub.s32 256, 256
      %12 = vsyncadd [#allocation3], %s11
      %s13 = sshll.u32 [#allocation2], 4
      %s14 = int_to_ptr.vmem [resolvable:$true] %s13
      %19 = dma.hbm_to_vmem [thread:$0]  %s0, 256, %s14, [#allocation3], 128, 128, 8
    $region5: #{tpu_custom_call.1} parent=1 // pred_fallthru
      _
    // Predicated region
    $region6: #{tpu_custom_call.1} parent=1 // pred_check
      _
    $region7: #{tpu_custom_call.1} parent=1 // pred_check_branch
      %21 = sbr.rel (0) target = $region9
    $region8: #{tpu_custom_call.1} parent=1 // pred_region
      %22 = dma.done [#allocation3], 256
    $region9: #{tpu_custom_call.1} parent=1 // pred_fallthru
      _
    %v23 = vld [vmem:[#allocation2] sm:$0xff]
    %v24 = vld [vmem:[#allocation2 + $0x8] sm:$0xff]
    %v25 = vmul.f32 %v23, %v23
    %v26 = vmul.f32 %v24, %v24
    %vm27 = vcmask 261120
    %v28 = vsel %vm27, %v25, 0.0
    %29 = vadd.xlane.f32.xlu0 %v28
    %v30 = vpop.xlane.xlu0 %29
    %v31 = vsel %vm27, %v26, 0.0
    %32 = vadd.xlane.f32.xlu0 %v31
    %v33 = vpop.xlane.xlu0 %32
    %v34 = vrcp.pop 32.0
    %v35 = vmul.f32 %v30, %v34
    %v36 = vmul.f32 %v33, %v34
    %v37 = vadd.f32 %v35, 1.1920929e-07
    %v38 = vadd.f32 %v36, 1.1920929e-07
    %v39 = vrsqrt.pop %v37
    %v40 = vrsqrt.pop %v38
    %v41 = vmul.f32 %v23, %v39
    %v42 = vmul.f32 %v24, %v40
    %43 = vst.msk [vmem:[#allocation5] sm:$0xff] %vm27, %v41
    %44 = vst.msk [vmem:[#allocation5 + $0x8] sm:$0xff] %vm27, %v42
    // Predicated region
    $region10: #{tpu_custom_call.1} parent=1 // pred_check
      _
    $region11: #{tpu_custom_call.1} parent=1 // pred_check_branch
      %46 = sbr.rel (0) target = $region13
    $region12: #{tpu_custom_call.1} parent=1 // pred_region
      %s48 = ssub.s32 256, 256
      %49 = vsyncadd [#allocation4], %s48
      %s50 = sshll.u32 [#allocation5], 4
      %s51 = int_to_ptr.vmem [resolvable:$true] %s50
      %56 = dma.vmem_to_hbm [thread:$0]  %s51, 256, %s1, [#allocation4], 128, 128, 8
    $region13: #{tpu_custom_call.1} parent=1 // pred_fallthru
      _
    // Predicated region
    $region14: #{tpu_custom_call.1} parent=1 // pred_check
      _
    $region15: #{tpu_custom_call.1} parent=1 // pred_check_branch
      %58 = sbr.rel (0) target = $region17
    $region16: #{tpu_custom_call.1} parent=1 // pred_region
      %59 = dma.done [#allocation4], 256
    $region17: #{tpu_custom_call.1} parent=1 // pred_fallthru
      _
    %60 = vsyncpa [#allocation3], 1
    %61 = vsyncpa [#allocation4], 1

</llo_original>
